<compile_context>
chip_gen: v7x
topology: tpu7x:2x2x1
jax: 0.10.0
libtpu: 0.0.40
codegen_flags: <defaults>
</compile_context>

<pallas_src>
import functools

import jax
import jax.numpy as jnp
from jax.experimental import pallas as pl
from jax.experimental.pallas import tpu as pltpu


def _round_up(x, m):
    return ((x + m - 1) // m) * m


# -----------------------------------------------------------------------------
# Fused multi-step kernel: embed + n_layers LSTM cells + decoder per grid step.
# -----------------------------------------------------------------------------
def _make_char_rnn_kernel(n_layers, hidden, batch):
    H, B = hidden, batch

    def kernel(tok_ref, emb_ref, w_ref, bias_ref, state_in_ref,
               logits_ref, state_ref):
        t = pl.program_id(0)

        # t == 0: copy the caller-provided packed state into the resident
        # output block (constant out BlockSpec keeps it in VMEM across steps).
        @pl.when(t == 0)
        def _():
            state_ref[...] = state_in_ref[...]

        # Embedding lookup: ids are SMEM scalars (scalar prefetch); gather one
        # (1, H) row per batch element by dynamic-indexing the VMEM-resident
        # (V, 1, H) table on its untiled leading dim.
        # TODO(synk): for large vocabularies switch to a manual HBM row-gather
        # DMA so the whole table is not kept resident.
        x = jnp.concatenate(
            [emb_ref[tok_ref[t * B + b]] for b in range(B)], axis=0)  # (B, H)

        state = state_ref[...]          # (B, n_layers*2H): [h_l, c_l] per layer
        new_parts = []
        for layer in range(n_layers):
            h = state[:, (2 * layer) * H:(2 * layer + 1) * H]
            c = state[:, (2 * layer + 1) * H:(2 * layer + 2) * H]
            # Two accumulated matmuls instead of concat([x, h]) @ W: the MXU is
            # essentially idle at these shapes, and this removes the 32-lane
            # concat shuffle (XLU/VPU are the binding units here).
            gates = (jnp.dot(x, w_ref[2 * layer],
                             preferred_element_type=jnp.float32)
                     + jnp.dot(h, w_ref[2 * layer + 1],
                               preferred_element_type=jnp.float32)
                     + bias_ref[layer])                               # (B, W)
            # Whole-tile transcendentals (2 EUP passes instead of 4 sliced),
            # then slice. PyTorch gate order: i, f, g, o.
            sg = jax.nn.sigmoid(gates)
            th = jnp.tanh(gates)
            i_g = sg[:, 0 * H:1 * H]
            f_g = sg[:, 1 * H:2 * H]
            g_g = th[:, 2 * H:3 * H]
            o_g = sg[:, 3 * H:4 * H]
            c_new = f_g * c + i_g * g_g
            h_new = o_g * jnp.tanh(c_new)
            new_parts += [h_new, c_new]
            x = h_new                                                 # next layer

        # Lane-dense packed state write: (B, n_layers*2*H) -> one unmasked vst.
        state_ref[...] = jnp.concatenate(new_parts, axis=1)

        # Decoder; output padded to 128 lanes (zero-padded weights/bias keep
        # the padded lanes exactly zero; sliced off in the wrapper).
        logits = (jnp.dot(x, w_ref[2 * n_layers],
                          preferred_element_type=jnp.float32)
                  + bias_ref[n_layers])                               # (B, W)
        logits_ref[...] = logits.reshape(1, B, -1)

    return kernel


# -----------------------------------------------------------------------------
# Multi-step wrapper: one pallas_call runs T autoregressive forward() steps.
# -----------------------------------------------------------------------------
@functools.partial(jax.jit, static_argnames=("output_size",))
def char_rnn_forward_seq(tokens, h0, c0, params, *, output_size):
    """tokens: (T, B) int32; h0/c0: (n_layers, B, H) f32.

    Returns (logits (T, B, output_size), (h_T, c_T)). T == 1 is exactly the
    PyTorch CharRNN.forward(input, hidden) semantics for one step.
    """
    T, B = tokens.shape
    n_layers, _, H = h0.shape
    W = params["w_slab"].shape[-1]
    S = 2 * n_layers * H
    V = params["emb3"].shape[0]

    # Pack state as one (B, n_layers*2*H) slab: [h_l0, c_l0, h_l1, c_l1, ...]
    state_in = jnp.concatenate(
        [jnp.concatenate([h0[l], c0[l]], axis=1) for l in range(n_layers)],
        axis=1)

    kernel = _make_char_rnn_kernel(n_layers, H, B)
    grid_spec = pltpu.PrefetchScalarGridSpec(
        num_scalar_prefetch=1,                       # token ids -> SMEM
        grid=(T,),
        in_specs=[
            # Constant index_maps -> weights stay resident in VMEM for all T.
            pl.BlockSpec((V, 1, H), lambda t, tok: (0, 0, 0)),          # emb
            pl.BlockSpec(params["w_slab"].shape, lambda t, tok: (0, 0, 0)),
            pl.BlockSpec(params["bias_slab"].shape, lambda t, tok: (0, 0, 0)),
            pl.BlockSpec((B, S), lambda t, tok: (0, 0)),                # state
        ],
        out_specs=[
            pl.BlockSpec((1, B, W), lambda t, tok: (t, 0, 0)),          # logits
            pl.BlockSpec((B, S), lambda t, tok: (0, 0)),                # state
        ],
    )
    logits_pad, state_out = pl.pallas_call(
        kernel,
        grid_spec=grid_spec,
        out_shape=(jax.ShapeDtypeStruct((T, B, W), jnp.float32),
                   jax.ShapeDtypeStruct((B, S), jnp.float32)),
        # state_in (flat input index 4, counting the scalar-prefetch tokens)
        # aliases the packed state output: no fresh HBM state buffer per call.
        input_output_aliases={4: 1},
        # Timesteps are sequential. (On v7x a second, "parallel" batch/sequence
        # grid axis would be needed to use the second TensorCore.)
        compiler_params=pltpu.CompilerParams(
            dimension_semantics=("arbitrary",)),
    )(tokens.reshape(-1).astype(jnp.int32), params["emb3"], params["w_slab"],
      params["bias_slab"], state_in)

    logits = logits_pad[:, :, :output_size]
    h1 = jnp.stack([state_out[:, 2 * l * H:(2 * l + 1) * H]
                    for l in range(n_layers)], 0)
    c1 = jnp.stack([state_out[:, (2 * l + 1) * H:(2 * l + 2) * H]
                    for l in range(n_layers)], 0)
    return logits, (h1, c1)


def char_rnn_forward(token_ids, hidden, params, *, output_size):
    """Exact CharRNN.forward: token_ids (B,) int, hidden = (h, c)."""
    h0, c0 = hidden
    logits, (h1, c1) = char_rnn_forward_seq(token_ids[None, :], h0, c0, params,
                                            output_size=output_size)
    return logits[0], (h1, c1)


# -----------------------------------------------------------------------------
# Parameter init (PyTorch-style) with packed kernel layouts + raw reference
# layouts.
# -----------------------------------------------------------------------------
def init_params(key, vocab, hidden, output, n_layers):
    H = hidden
    ks = jax.random.split(key, 3 + 4 * n_layers)
    k = 1.0 / jnp.sqrt(H)
    gate_w = 4 * H
    W = max(_round_up(gate_w, 128), _round_up(output, 128))

    emb = jax.random.normal(ks[0], (vocab, H), jnp.float32)            # N(0, 1)
    wdec_t = jax.random.uniform(ks[1], (H, output), jnp.float32, -k, k)
    bdec = jax.random.uniform(ks[2], (1, output), jnp.float32, -k, k)

    params = {
        # raw layouts (pure-JAX reference)
        "emb": emb, "wih_t": [], "whh_t": [], "b": [],
        "wdec_t": wdec_t, "bdec": bdec,
        # kernel layouts
        "emb3": emb.reshape(vocab, 1, H),
    }
    # Single weight slab [wih_0, whh_0, wih_1, whh_1, wdec_pad] and single bias
    # slab [b_0, b_1, bdec_pad]. INVARIANT: padded columns are zero.
    w_slab = jnp.zeros((2 * n_layers + 1, H, W), jnp.float32)
    bias_slab = jnp.zeros((n_layers + 1, 1, W), jnp.float32)
    for layer in range(n_layers):
        ki = ks[3 + 4 * layer: 3 + 4 * (layer + 1)]
        wih_t = jax.random.uniform(ki[0], (H, gate_w), jnp.float32, -k, k)
        whh_t = jax.random.uniform(ki[1], (H, gate_w), jnp.float32, -k, k)
        b_ih = jax.random.uniform(ki[2], (1, gate_w), jnp.float32, -k, k)
        b_hh = jax.random.uniform(ki[3], (1, gate_w), jnp.float32, -k, k)
        params["wih_t"].append(wih_t)
        params["whh_t"].append(whh_t)
        params["b"].append(b_ih + b_hh)
        w_slab = w_slab.at[2 * layer, :, :gate_w].set(wih_t)
        w_slab = w_slab.at[2 * layer + 1, :, :gate_w].set(whh_t)
        bias_slab = bias_slab.at[layer, :, :gate_w].set(b_ih + b_hh)
    w_slab = w_slab.at[2 * n_layers, :, :output].set(wdec_t)
    bias_slab = bias_slab.at[n_layers, :, :output].set(bdec)
    params["w_slab"] = w_slab
    params["bias_slab"] = bias_slab
    return params


# -----------------------------------------------------------------------------
# Pure-JAX reference (single step == PyTorch forward, and a T-step loop).
# -----------------------------------------------------------------------------
def reference_step(tokens, h0, c0, params):
    x = params["emb"][tokens]
    H = h0.shape[-1]
    hs, cs = [], []
    for layer in range(h0.shape[0]):
        gates = (x @ params["wih_t"][layer]
                 + h0[layer] @ params["whh_t"][layer] + params["b"][layer])
        i = jax.nn.sigmoid(gates[:, :H])
        f = jax.nn.sigmoid(gates[:, H:2 * H])
        g = jnp.tanh(gates[:, 2 * H:3 * H])
        o = jax.nn.sigmoid(gates[:, 3 * H:4 * H])
        c = f * c0[layer] + i * g
        h = o * jnp.tanh(c)
        hs.append(h)
        cs.append(c)
        x = h
    logits = x @ params["wdec_t"] + params["bdec"]
    return logits, (jnp.stack(hs, 0), jnp.stack(cs, 0))


def reference_seq(tokens, h0, c0, params):
    logits_all = []
    h, c = h0, c0
    for t in range(tokens.shape[0]):
        lg, (h, c) = reference_step(tokens[t], h, c, params)
        logits_all.append(lg)
    return jnp.stack(logits_all, 0), (h, c)


if __name__ == "__main__":
    vocab = 65          # input_size (char vocabulary)
    hidden = 32
    output = 65         # output_size
    n_layers = 2
    batch = 2
    seq = 8             # number of fused autoregressive steps

    key = jax.random.PRNGKey(0)
    kp, kt = jax.random.split(key)
    params = init_params(kp, vocab, hidden, output, n_layers)

    tokens = jax.random.randint(kt, (seq, batch), 0, vocab, dtype=jnp.int32)
    h0 = jnp.zeros((n_layers, batch, hidden), jnp.float32)   # init_hidden()
    c0 = jnp.zeros((n_layers, batch, hidden), jnp.float32)

    # Multi-step fused kernel: T forward() steps in one pallas_call.
    logits, (h1, c1) = char_rnn_forward_seq(tokens, h0, c0, params,
                                            output_size=output)
    logits, h1, c1 = jax.block_until_ready((logits, h1, c1))

    ref_logits, (ref_h, ref_c) = reference_seq(tokens, h0, c0, params)
    assert logits.shape == (seq, batch, output)
    assert h1.shape == (n_layers, batch, hidden)
    assert c1.shape == (n_layers, batch, hidden)
    assert jnp.allclose(logits, ref_logits, atol=1e-4, rtol=1e-4)
    assert jnp.allclose(h1, ref_h, atol=1e-4, rtol=1e-4)
    assert jnp.allclose(c1, ref_c, atol=1e-4, rtol=1e-4)

    # Single-step call == exact CharRNN.forward(input, hidden).
    step_logits, _ = char_rnn_forward(tokens[0], (h0, c0), params,
                                      output_size=output)
    step_logits = jax.block_until_ready(step_logits)
    r_logits, _ = reference_step(tokens[0], h0, c0, params)
    assert step_logits.shape == (batch, output)
    assert jnp.allclose(step_logits, r_logits, atol=1e-4, rtol=1e-4)

    print("KERNEL_OK")
</pallas_src>

<mosaic_0001>
module attributes {stable_mosaic.version = 11 : i64} {
  func.func @kernel(%arg0: i32, %arg1: memref<16xi32, #tpu.memory_space<smem>>, %arg2: memref<65x1x32xf32, #tpu.memory_space<vmem>>, %arg3: memref<5x32x128xf32, #tpu.memory_space<vmem>>, %arg4: memref<3x1x128xf32, #tpu.memory_space<vmem>>, %arg5: memref<2x128xf32, #tpu.memory_space<vmem>>, %arg6: memref<1x2x128xf32, #tpu.memory_space<vmem>>, %arg7: memref<2x128xf32, #tpu.memory_space<vmem>>) attributes {dimension_semantics = [#tpu.dimension_semantics<arbitrary>], iteration_bounds = array<i64: 8>, scalar_prefetch = 1 : i64, scratch_operands = 0 : i64, tpu.core_type = #tpu.core_type<tc>, window_params = [{pipeline_mode = #tpu.pipeline_mode<synchronous>, transform_indices = @transform_0, window_bounds = array<i64: 65, 1, 32>}, {pipeline_mode = #tpu.pipeline_mode<synchronous>, transform_indices = @transform_1, window_bounds = array<i64: 5, 32, 128>}, {pipeline_mode = #tpu.pipeline_mode<synchronous>, transform_indices = @transform_2, window_bounds = array<i64: 3, 1, 128>}, {pipeline_mode = #tpu.pipeline_mode<synchronous>, transform_indices = @transform_3, window_bounds = array<i64: 2, 128>}, {transform_indices = @transform_4, window_bounds = array<i64: 1, 2, 128>}, {pipeline_mode = #tpu.pipeline_mode<synchronous>, transform_indices = @transform_5, window_bounds = array<i64: 2, 128>}]} {
    %c0_i32 = arith.constant 0 : i32
    %0 = arith.cmpi eq, %arg0, %c0_i32 : i32
    %1 = arith.extui %0 : i1 to i32
    %c0_i32_0 = arith.constant 0 : i32
    %2 = arith.cmpi ne, %1, %c0_i32_0 : i32
    scf.if %2 {
      %c0_39 = arith.constant 0 : index
      %c0_40 = arith.constant 0 : index
      %86 = vector.load %arg5[%c0_39, %c0_40] : memref<2x128xf32, #tpu.memory_space<vmem>>, vector<2x128xf32>
      %c0_41 = arith.constant 0 : index
      %c0_42 = arith.constant 0 : index
      %87 = vector.load %arg7[%c0_41, %c0_42] : memref<2x128xf32, #tpu.memory_space<vmem>>, vector<2x128xf32>
      tpu.vector_store %arg7[%c0_41, %c0_42], %86 {strides = array<i32>} : memref<2x128xf32, #tpu.memory_space<vmem>>, vector<2x128xf32>,
    } else {
    }
    %c2_i32 = arith.constant 2 : i32
    %3 = arith.muli %arg0, %c2_i32 : i32
    %c0_i32_1 = arith.constant 0 : i32
    %4 = arith.addi %3, %c0_i32_1 : i32
    %5 = arith.index_cast %4 : i32 to index
    %6 = memref.load %arg1[%5] : memref<16xi32, #tpu.memory_space<smem>>
    %7 = arith.index_cast %6 : i32 to index
    %c0 = arith.constant 0 : index
    %c0_2 = arith.constant 0 : index
    %8 = vector.load %arg2[%7, %c0, %c0_2] : memref<65x1x32xf32, #tpu.memory_space<vmem>>, vector<1x1x32xf32>
    %9 = vector.shape_cast %8 : vector<1x1x32xf32> to vector<1x32xf32>
    %c2_i32_3 = arith.constant 2 : i32
    %10 = arith.muli %arg0, %c2_i32_3 : i32
    %c1_i32 = arith.constant 1 : i32
    %11 = arith.addi %10, %c1_i32 : i32
    %12 = arith.index_cast %11 : i32 to index
    %13 = memref.load %arg1[%12] : memref<16xi32, #tpu.memory_space<smem>>
    %14 = arith.index_cast %13 : i32 to index
    %c0_4 = arith.constant 0 : index
    %c0_5 = arith.constant 0 : index
    %15 = vector.load %arg2[%14, %c0_4, %c0_5] : memref<65x1x32xf32, #tpu.memory_space<vmem>>, vector<1x1x32xf32>
    %16 = vector.shape_cast %15 : vector<1x1x32xf32> to vector<1x32xf32>
    %17 = tpu.concatenate %9, %16 in 0 : vector<1x32xf32>, vector<1x32xf32> -> vector<2x32xf32>
    %c0_6 = arith.constant 0 : index
    %c0_7 = arith.constant 0 : index
    %18 = vector.load %arg7[%c0_6, %c0_7] : memref<2x128xf32, #tpu.memory_space<vmem>>, vector<2x128xf32>
    %19 = vector.extract_strided_slice %18 {offsets = [0, 0], sizes = [2, 32], strides = [1, 1]} : vector<2x128xf32> to vector<2x32xf32>
    %20 = vector.extract_strided_slice %18 {offsets = [0, 32], sizes = [2, 32], strides = [1, 1]} : vector<2x128xf32> to vector<2x32xf32>
    %c0_8 = arith.constant 0 : index
    %c0_9 = arith.constant 0 : index
    %c0_10 = arith.constant 0 : index
    %21 = vector.load %arg3[%c0_8, %c0_9, %c0_10] : memref<5x32x128xf32, #tpu.memory_space<vmem>>, vector<1x32x128xf32>
    %22 = vector.shape_cast %21 : vector<1x32x128xf32> to vector<32x128xf32>
    %cst = arith.constant dense<0.000000e+00> : vector<2x128xf32>
    %23 = tpu.matmul %17, %22, %cst {dimension_numbers = #tpu.dot_dimension_numbers<[1], [0], [0], [1], [0, 0, 1, 1], [], []>} : vector<2x32xf32>, vector<32x128xf32>, vector<2x128xf32> -> vector<2x128xf32>
    %c1 = arith.constant 1 : index
    %c0_11 = arith.constant 0 : index
    %c0_12 = arith.constant 0 : index
    %24 = vector.load %arg3[%c1, %c0_11, %c0_12] : memref<5x32x128xf32, #tpu.memory_space<vmem>>, vector<1x32x128xf32>
    %25 = vector.shape_cast %24 : vector<1x32x128xf32> to vector<32x128xf32>
    %cst_13 = arith.constant dense<0.000000e+00> : vector<2x128xf32>
    %26 = tpu.matmul %19, %25, %cst_13 {dimension_numbers = #tpu.dot_dimension_numbers<[1], [0], [0], [1], [0, 0, 1, 1], [], []>} : vector<2x32xf32>, vector<32x128xf32>, vector<2x128xf32> -> vector<2x128xf32>
    %27 = arith.addf %23, %26 : vector<2x128xf32>
    %c0_14 = arith.constant 0 : index
    %c0_15 = arith.constant 0 : index
    %c0_16 = arith.constant 0 : index
    %28 = vector.load %arg4[%c0_14, %c0_15, %c0_16] : memref<3x1x128xf32, #tpu.memory_space<vmem>>, vector<1x1x128xf32>
    %29 = vector.shape_cast %28 : vector<1x1x128xf32> to vector<1x128xf32>
    %30 = vector.broadcast %29 : vector<1x128xf32> to vector<2x128xf32>
    %31 = arith.addf %27, %30 : vector<2x128xf32>
    %32 = arith.negf %31 : vector<2x128xf32>
    %33 = math.exp %32 : vector<2x128xf32>
    %cst_17 = arith.constant 1.000000e+00 : f32
    %34 = vector.broadcast %cst_17 : f32 to vector<2x128xf32>
    %35 = arith.addf %34, %33 : vector<2x128xf32>
    %36 = arith.divf %34, %35 : vector<2x128xf32>
    %37 = math.tanh %31 : vector<2x128xf32>
    %38 = vector.extract_strided_slice %36 {offsets = [0, 0], sizes = [2, 32], strides = [1, 1]} : vector<2x128xf32> to vector<2x32xf32>
    %39 = vector.extract_strided_slice %36 {offsets = [0, 32], sizes = [2, 32], strides = [1, 1]} : vector<2x128xf32> to vector<2x32xf32>
    %40 = vector.extract_strided_slice %37 {offsets = [0, 64], sizes = [2, 32], strides = [1, 1]} : vector<2x128xf32> to vector<2x32xf32>
    %41 = vector.extract_strided_slice %36 {offsets = [0, 96], sizes = [2, 32], strides = [1, 1]} : vector<2x128xf32> to vector<2x32xf32>
    %42 = arith.mulf %39, %20 : vector<2x32xf32>
    %43 = arith.mulf %38, %40 : vector<2x32xf32>
    %44 = arith.addf %42, %43 : vector<2x32xf32>
    %45 = math.tanh %44 : vector<2x32xf32>
    %46 = arith.mulf %41, %45 : vector<2x32xf32>
    %47 = vector.extract_strided_slice %18 {offsets = [0, 64], sizes = [2, 32], strides = [1, 1]} : vector<2x128xf32> to vector<2x32xf32>
    %48 = vector.extract_strided_slice %18 {offsets = [0, 96], sizes = [2, 32], strides = [1, 1]} : vector<2x128xf32> to vector<2x32xf32>
    %c2 = arith.constant 2 : index
    %c0_18 = arith.constant 0 : index
    %c0_19 = arith.constant 0 : index
    %49 = vector.load %arg3[%c2, %c0_18, %c0_19] : memref<5x32x128xf32, #tpu.memory_space<vmem>>, vector<1x32x128xf32>
    %50 = vector.shape_cast %49 : vector<1x32x128xf32> to vector<32x128xf32>
    %cst_20 = arith.constant dense<0.000000e+00> : vector<2x128xf32>
    %51 = tpu.matmul %46, %50, %cst_20 {dimension_numbers = #tpu.dot_dimension_numbers<[1], [0], [0], [1], [0, 0, 1, 1], [], []>} : vector<2x32xf32>, vector<32x128xf32>, vector<2x128xf32> -> vector<2x128xf32>
    %c3 = arith.constant 3 : index
    %c0_21 = arith.constant 0 : index
    %c0_22 = arith.constant 0 : index
    %52 = vector.load %arg3[%c3, %c0_21, %c0_22] : memref<5x32x128xf32, #tpu.memory_space<vmem>>, vector<1x32x128xf32>
    %53 = vector.shape_cast %52 : vector<1x32x128xf32> to vector<32x128xf32>
    %cst_23 = arith.constant dense<0.000000e+00> : vector<2x128xf32>
    %54 = tpu.matmul %47, %53, %cst_23 {dimension_numbers = #tpu.dot_dimension_numbers<[1], [0], [0], [1], [0, 0, 1, 1], [], []>} : vector<2x32xf32>, vector<32x128xf32>, vector<2x128xf32> -> vector<2x128xf32>
    %55 = arith.addf %51, %54 : vector<2x128xf32>
    %c1_24 = arith.constant 1 : index
    %c0_25 = arith.constant 0 : index
    %c0_26 = arith.constant 0 : index
    %56 = vector.load %arg4[%c1_24, %c0_25, %c0_26] : memref<3x1x128xf32, #tpu.memory_space<vmem>>, vector<1x1x128xf32>
    %57 = vector.shape_cast %56 : vector<1x1x128xf32> to vector<1x128xf32>
    %58 = vector.broadcast %57 : vector<1x128xf32> to vector<2x128xf32>
    %59 = arith.addf %55, %58 : vector<2x128xf32>
    %60 = arith.negf %59 : vector<2x128xf32>
    %61 = math.exp %60 : vector<2x128xf32>
    %cst_27 = arith.constant 1.000000e+00 : f32
    %62 = vector.broadcast %cst_27 : f32 to vector<2x128xf32>
    %63 = arith.addf %62, %61 : vector<2x128xf32>
    %64 = arith.divf %62, %63 : vector<2x128xf32>
    %65 = math.tanh %59 : vector<2x128xf32>
    %66 = vector.extract_strided_slice %64 {offsets = [0, 0], sizes = [2, 32], strides = [1, 1]} : vector<2x128xf32> to vector<2x32xf32>
    %67 = vector.extract_strided_slice %64 {offsets = [0, 32], sizes = [2, 32], strides = [1, 1]} : vector<2x128xf32> to vector<2x32xf32>
    %68 = vector.extract_strided_slice %65 {offsets = [0, 64], sizes = [2, 32], strides = [1, 1]} : vector<2x128xf32> to vector<2x32xf32>
    %69 = vector.extract_strided_slice %64 {offsets = [0, 96], sizes = [2, 32], strides = [1, 1]} : vector<2x128xf32> to vector<2x32xf32>
    %70 = arith.mulf %67, %48 : vector<2x32xf32>
    %71 = arith.mulf %66, %68 : vector<2x32xf32>
    %72 = arith.addf %70, %71 : vector<2x32xf32>
    %73 = math.tanh %72 : vector<2x32xf32>
    %74 = arith.mulf %69, %73 : vector<2x32xf32>
    %75 = tpu.concatenate %46, %44, %74, %72 in 1 : vector<2x32xf32>, vector<2x32xf32>, vector<2x32xf32>, vector<2x32xf32> -> vector<2x128xf32>
    %c0_28 = arith.constant 0 : index
    %c0_29 = arith.constant 0 : index
    %76 = vector.load %arg7[%c0_28, %c0_29] : memref<2x128xf32, #tpu.memory_space<vmem>>, vector<2x128xf32>
    tpu.vector_store %arg7[%c0_28, %c0_29], %75 {strides = array<i32>} : memref<2x128xf32, #tpu.memory_space<vmem>>, vector<2x128xf32>,
    %c4 = arith.constant 4 : index
    %c0_30 = arith.constant 0 : index
    %c0_31 = arith.constant 0 : index
    %77 = vector.load %arg3[%c4, %c0_30, %c0_31] : memref<5x32x128xf32, #tpu.memory_space<vmem>>, vector<1x32x128xf32>
    %78 = vector.shape_cast %77 : vector<1x32x128xf32> to vector<32x128xf32>
    %cst_32 = arith.constant dense<0.000000e+00> : vector<2x128xf32>
    %79 = tpu.matmul %74, %78, %cst_32 {dimension_numbers = #tpu.dot_dimension_numbers<[1], [0], [0], [1], [0, 0, 1, 1], [], []>} : vector<2x32xf32>, vector<32x128xf32>, vector<2x128xf32> -> vector<2x128xf32>
    %c2_33 = arith.constant 2 : index
    %c0_34 = arith.constant 0 : index
    %c0_35 = arith.constant 0 : index
    %80 = vector.load %arg4[%c2_33, %c0_34, %c0_35] : memref<3x1x128xf32, #tpu.memory_space<vmem>>, vector<1x1x128xf32>
    %81 = vector.shape_cast %80 : vector<1x1x128xf32> to vector<1x128xf32>
    %82 = vector.broadcast %81 : vector<1x128xf32> to vector<2x128xf32>
    %83 = arith.addf %79, %82 : vector<2x128xf32>
    %84 = vector.shape_cast %83 : vector<2x128xf32> to vector<1x2x128xf32>
    %c0_36 = arith.constant 0 : index
    %c0_37 = arith.constant 0 : index
    %c0_38 = arith.constant 0 : index
    %85 = vector.load %arg6[%c0_36, %c0_37, %c0_38] : memref<1x2x128xf32, #tpu.memory_space<vmem>>, vector<1x2x128xf32>
    tpu.vector_store %arg6[%c0_36, %c0_37, %c0_38], %84 {strides = array<i32>} : memref<1x2x128xf32, #tpu.memory_space<vmem>>, vector<1x2x128xf32>,
    return
  }
  func.func @transform_0(%arg0: i32, %arg1: memref<16xi32, #tpu.memory_space<smem>>) -> (i32, i32, i32) {
    %c0_i32 = arith.constant 0 : i32
    %c0_i32_0 = arith.constant 0 : i32
    %c0_i32_1 = arith.constant 0 : i32
    %c0_i32_2 = arith.constant 0 : i32
    return %c0_i32, %c0_i32_0, %c0_i32_1 : i32, i32, i32
  }
  func.func @transform_1(%arg0: i32, %arg1: memref<16xi32, #tpu.memory_space<smem>>) -> (i32, i32, i32) {
    %c0_i32 = arith.constant 0 : i32
    %c0_i32_0 = arith.constant 0 : i32
    %c0_i32_1 = arith.constant 0 : i32
    %c0_i32_2 = arith.constant 0 : i32
    return %c0_i32, %c0_i32_0, %c0_i32_1 : i32, i32, i32
  }
  func.func @transform_2(%arg0: i32, %arg1: memref<16xi32, #tpu.memory_space<smem>>) -> (i32, i32, i32) {
    %c0_i32 = arith.constant 0 : i32
    %c0_i32_0 = arith.constant 0 : i32
    %c0_i32_1 = arith.constant 0 : i32
    %c0_i32_2 = arith.constant 0 : i32
    return %c0_i32, %c0_i32_0, %c0_i32_1 : i32, i32, i32
  }
  func.func @transform_3(%arg0: i32, %arg1: memref<16xi32, #tpu.memory_space<smem>>) -> (i32, i32) {
    %c0_i32 = arith.constant 0 : i32
    %c0_i32_0 = arith.constant 0 : i32
    %c0_i32_1 = arith.constant 0 : i32
    return %c0_i32, %c0_i32_0 : i32, i32
  }
  func.func @transform_4(%arg0: i32, %arg1: memref<16xi32, #tpu.memory_space<smem>>) -> (i32, i32, i32) {
    %c0_i32 = arith.constant 0 : i32
    %c0_i32_0 = arith.constant 0 : i32
    %c0_i32_1 = arith.constant 0 : i32
    return %arg0, %c0_i32, %c0_i32_0 : i32, i32, i32
  }
  func.func @transform_5(%arg0: i32, %arg1: memref<16xi32, #tpu.memory_space<smem>>) -> (i32, i32) {
    %c0_i32 = arith.constant 0 : i32
    %c0_i32_0 = arith.constant 0 : i32
    %c0_i32_1 = arith.constant 0 : i32
    return %c0_i32, %c0_i32_0 : i32, i32
  }
}

</mosaic_0001>

<llo_original>
// kernel: char_rnn_forward_seq.1
$region0: #{char_rnn_forward_seq.1}
  #allocation0 [shape = 'u32[]', space=smem, size = 0x4, offset = 0x4, fixed_abs, tag = 'smem constant byte address 0x4 - core index']
  #allocation1 [shape = 'u32[144,128]{1,0:T(1,128)}', space=vmem, size = 0x12000, scoped, tag = 'internal scratch']
  #allocation2 [shape = 's32[1]{0}', space=sflag, size = 0x4, scoped, tag = 'scoped memory for char_rnn_forward_seq.1']
  #allocation3 [shape = 'u8[512]{0}', space=smem, size = 0x200, scoped, tag = 'prefetched SMEM operand 0']
  %s0 = inlined_call_operand.vmem [shape: s32[16], index: 0, kind: input, shape index: {}]
  %s1 = inlined_call_operand.vmem [shape: f32[65,1,32], index: 1, kind: input, shape index: {}]
  %s2 = inlined_call_operand.vmem [shape: f32[5,32,128], index: 2, kind: input, shape index: {}]
  %s3 = inlined_call_operand.vmem [shape: f32[3,1,128], index: 3, kind: input, shape index: {}]
  %s4 = inlined_call_operand.vmem [shape: f32[2,128], index: 4, kind: input, shape index: {}, may-alias: {4,6}]
  %s5 = inlined_call_operand.hbm [shape: f32[8,2,128], index: 5, kind: output, shape index: {0}]
  %s6 = inlined_call_operand.vmem [shape: f32[2,128], index: 6, kind: output, shape index: {1}, may-alias: {4,6}]
  %7 = xla_tuple %s5, %s6
  %s8 = sld [smem:[#allocation0]]
  $region61: #{char_rnn_forward_seq.1} parent=0
    _
  %s10 = ssub.s32 1, %s8
  %s11 = scalar_select 0, %s10, %s8
  %s12 = sshll.u32 %s0, 4
  %s13 = int_to_ptr.vmem [resolvable:$true] %s12
  %15 = dma.vmem_to_smem %s13, 16, [#allocation3], [#allocation2]
  %16 = dma.done [#allocation2], 16
  %17 = sfence
  $region1: #{char_rnn_forward_seq.1} parent=0
    #allocation4 [shape = 'u8[2048]{0}', space=vmem, size = 0x800, scoped, tag = 'output window, operand 0']
    #allocation5 [shape = 's32[2]{0}', space=sflag, size = 0x8, scoped, tag = 'scoped memory for char_rnn_forward_seq.1']
    %18 = vsyncpa [#allocation5], 0
    %s19 = scalar_lea.sflag [#allocation5], 1
    %20 = vsyncpa %s19, 0
    loop: start=0, step=1, limit=10
    $region2: #{char_rnn_forward_seq.1} parent=1 // loop_pre_header
      _
    $region3: #{char_rnn_forward_seq.1} parent=1 // loop_header
      %s22 = sphi 0, %s26
      %p23 = scmp.ge.s32.totalorder %s22, 10
      %s30 = sphi 0, %s30
      %s32 = sphi 0, %s30
      %s33 = sphi 0, %s32
      %s47 = sphi 0, %s33
      %s51 = sphi 0, %s51
      %s53 = sphi 0, %s51
      %s54 = sphi 0, %s53
      %s68 = sphi 0, %s54
      %s72 = sphi 0, %s72
      %s74 = sphi 0, %s72
      %s75 = sphi 0, %s74
      %s89 = sphi 0, %s75
      %s93 = sphi 0, %s93
      %s95 = sphi 0, %s93
      %s96 = sphi 0, %s95
      %s110 = sphi 0, %s96
      %s116 = sphi 0, %s118
      %s119 = sphi 0, %s116
      %s120 = sphi 0, %s119
      %s136 = sphi 0, %s120
      %s140 = sphi 0, %s140
      %s142 = sphi 0, %s140
      %s143 = sphi 0, %s142
      %s157 = sphi 0, %s143
    $region4: #{char_rnn_forward_seq.1} parent=1 // loop_header_branch
      %25 = sbr.rel (%p23) target = $region8
    $region5: #{char_rnn_forward_seq.1} parent=1 // loop_body
      %s27 = ssub.s32 %s22, 1
      %s28 = ssub.s32 %s22, 2
      %s29 = sadd.s32 %s22, 1
      %s31 = sadd.s32 %s30, 1
      %p34 = scmp.eq.s32.totalorder %s22, 7
      %p35 = scmp.ne.s32.totalorder %s30, %s32
      %p36 = scmp.eq.s32.totalorder %s22, 0
      %p37 = por %p35, %p36
      %p38 = scmp.ne.s32.totalorder %s30, %s32
      %p39 = scmp.eq.s32.totalorder %s27, 7
      %p40 = por %p38, %p39
      %p41 = scmp.ne.s32.totalorder %s32, %s33
      %p42 = scmp.eq.s32.totalorder %s27, 0
      %p43 = por %p41, %p42
      %p44 = scmp.ne.s32.totalorder %s32, %s33
      %p45 = scmp.eq.s32.totalorder %s28, 7
      %p46 = por %p44, %p45
      %p48 = scmp.ne.s32.totalorder %s33, %s47
      %p49 = scmp.eq.s32.totalorder %s28, 0
      %p50 = por %p48, %p49
      %s52 = sadd.s32 %s51, 1
      %p55 = scmp.eq.s32.totalorder %s22, 7
      %p56 = scmp.ne.s32.totalorder %s51, %s53
      %p57 = scmp.eq.s32.totalorder %s22, 0
      %p58 = por %p56, %p57
      %p59 = scmp.ne.s32.totalorder %s51, %s53
      %p60 = scmp.eq.s32.totalorder %s27, 7
      %p61 = por %p59, %p60
      %p62 = scmp.ne.s32.totalorder %s53, %s54
      %p63 = scmp.eq.s32.totalorder %s27, 0
      %p64 = por %p62, %p63
      %p65 = scmp.ne.s32.totalorder %s53, %s54
      %p66 = scmp.eq.s32.totalorder %s28, 7
      %p67 = por %p65, %p66
      %p69 = scmp.ne.s32.totalorder %s54, %s68
      %p70 = scmp.eq.s32.totalorder %s28, 0
      %p71 = por %p69, %p70
      %s73 = sadd.s32 %s72, 1
      %p76 = scmp.eq.s32.totalorder %s22, 7
      %p77 = scmp.ne.s32.totalorder %s72, %s74
      %p78 = scmp.eq.s32.totalorder %s22, 0
      %p79 = por %p77, %p78
      %p80 = scmp.ne.s32.totalorder %s72, %s74
      %p81 = scmp.eq.s32.totalorder %s27, 7
      %p82 = por %p80, %p81
      %p83 = scmp.ne.s32.totalorder %s74, %s75
      %p84 = scmp.eq.s32.totalorder %s27, 0
      %p85 = por %p83, %p84
      %p86 = scmp.ne.s32.totalorder %s74, %s75
      %p87 = scmp.eq.s32.totalorder %s28, 7
      %p88 = por %p86, %p87
      %p90 = scmp.ne.s32.totalorder %s75, %s89
      %p91 = scmp.eq.s32.totalorder %s28, 0
      %p92 = por %p90, %p91
      %s94 = sadd.s32 %s93, 1
      %p97 = scmp.eq.s32.totalorder %s22, 7
      %p98 = scmp.ne.s32.totalorder %s93, %s95
      %p99 = scmp.eq.s32.totalorder %s22, 0
      %p100 = por %p98, %p99
      %p101 = scmp.ne.s32.totalorder %s93, %s95
      %p102 = scmp.eq.s32.totalorder %s27, 7
      %p103 = por %p101, %p102
      %p104 = scmp.ne.s32.totalorder %s95, %s96
      %p105 = scmp.eq.s32.totalorder %s27, 0
      %p106 = por %p104, %p105
      %p107 = scmp.ne.s32.totalorder %s95, %s96
      %p108 = scmp.eq.s32.totalorder %s28, 7
      %p109 = por %p107, %p108
      %p111 = scmp.ne.s32.totalorder %s96, %s110
      %p112 = scmp.eq.s32.totalorder %s28, 0
      %p113 = por %p111, %p112
      %s114 = ssub.s32 %s22, %s29
      %p115 = scmp.eq.s32.totalorder %s114, 0
      %s117 = sadd.s32 %s116, 1
      %s118 = scalar_select %p115, %s116, %s117
      %p121 = pneg %p115
      %p122 = scmp.eq.s32.totalorder %s22, 7
      %p123 = por %p121, %p122
      %p124 = scmp.ne.s32.totalorder %s116, %s119
      %p125 = scmp.eq.s32.totalorder %s22, 0
      %p126 = por %p124, %p125
      %p127 = scmp.ne.s32.totalorder %s116, %s119
      %p128 = scmp.eq.s32.totalorder %s27, 7
      %p129 = por %p127, %p128
      %p130 = scmp.ne.s32.totalorder %s119, %s120
      %p131 = scmp.eq.s32.totalorder %s27, 0
      %p132 = por %p130, %p131
      %p133 = scmp.ne.s32.totalorder %s119, %s120
      %p134 = scmp.eq.s32.totalorder %s28, 7
      %p135 = por %p133, %p134
      %p137 = scmp.ne.s32.totalorder %s120, %s136
      %p138 = scmp.eq.s32.totalorder %s28, 0
      %p139 = por %p137, %p138
      %s141 = sadd.s32 %s140, 1
      %p144 = scmp.eq.s32.totalorder %s22, 7
      %p145 = scmp.ne.s32.totalorder %s140, %s142
      %p146 = scmp.eq.s32.totalorder %s22, 0
      %p147 = por %p145, %p146
      %p148 = scmp.ne.s32.totalorder %s140, %s142
      %p149 = scmp.eq.s32.totalorder %s27, 7
      %p150 = por %p148, %p149
      %p151 = scmp.ne.s32.totalorder %s142, %s143
      %p152 = scmp.eq.s32.totalorder %s27, 0
      %p153 = por %p151, %p152
      %p154 = scmp.ne.s32.totalorder %s142, %s143
      %p155 = scmp.eq.s32.totalorder %s28, 7
      %p156 = por %p154, %p155
      %p158 = scmp.ne.s32.totalorder %s143, %s157
      %p159 = scmp.eq.s32.totalorder %s28, 0
      %p160 = por %p158, %p159
      %p161 = scmp.le.s32.totalorder 1, %s22
      %p162 = scmp.lt.s32.totalorder %s22, 9
      %p163 = pnand %p161, %p162
      %p164 = pneg %p163
      // Predicated region
      $region9: #{char_rnn_forward_seq.1} parent=5 // pred_check
        _
      $region10: #{char_rnn_forward_seq.1} parent=5 // pred_check_branch
        %166 = sbr.rel (%p163) target = $region12
      $region11: #{char_rnn_forward_seq.1} parent=5 // pred_region
        %s167 = ssub.s32 %s22, 1
        // Predicated region
        $region13: #{char_rnn_forward_seq.1} parent=11 // pred_check
          %p168 = pneg %p43
        $region14: #{char_rnn_forward_seq.1} parent=11 // pred_check_branch
          %170 = sbr.rel (%p168) target = $region16
        $region15: #{char_rnn_forward_seq.1} parent=11 // pred_region
          _
        $region16: #{char_rnn_forward_seq.1} parent=11 // pred_fallthru
          _
        // Predicated region
        $region17: #{char_rnn_forward_seq.1} parent=11 // pred_check
          %p171 = pneg %p64
        $region18: #{char_rnn_forward_seq.1} parent=11 // pred_check_branch
          %173 = sbr.rel (%p171) target = $region20
        $region19: #{char_rnn_forward_seq.1} parent=11 // pred_region
          _
        $region20: #{char_rnn_forward_seq.1} parent=11 // pred_fallthru
          _
        // Predicated region
        $region21: #{char_rnn_forward_seq.1} parent=11 // pred_check
          %p174 = pneg %p85
        $region22: #{char_rnn_forward_seq.1} parent=11 // pred_check_branch
          %176 = sbr.rel (%p174) target = $region24
        $region23: #{char_rnn_forward_seq.1} parent=11 // pred_region
          _
        $region24: #{char_rnn_forward_seq.1} parent=11 // pred_fallthru
          _
        // Predicated region
        $region25: #{char_rnn_forward_seq.1} parent=11 // pred_check
          %p177 = pneg %p106
        $region26: #{char_rnn_forward_seq.1} parent=11 // pred_check_branch
          %179 = sbr.rel (%p177) target = $region28
        $region27: #{char_rnn_forward_seq.1} parent=11 // pred_region
          _
        $region28: #{char_rnn_forward_seq.1} parent=11 // pred_fallthru
          _
      $region12: #{char_rnn_forward_seq.1} parent=5 // pred_fallthru
        _
      %p180 = scmp.lt.s32.totalorder %s22, 8
      // Predicated region
      $region29: #{char_rnn_forward_seq.1} parent=5 // pred_check
        %p181 = pneg %p180
      $region30: #{char_rnn_forward_seq.1} parent=5 // pred_check_branch
        %183 = sbr.rel (%p181) target = $region32
      $region31: #{char_rnn_forward_seq.1} parent=5 // pred_region
        _
      $region32: #{char_rnn_forward_seq.1} parent=5 // pred_fallthru
        _
      %p184 = scmp.le.s32.totalorder 1, %s22
      %p185 = scmp.lt.s32.totalorder %s22, 9
      %p186 = pnand %p184, %p185
      %p187 = pneg %p186
      // Predicated region
      $region33: #{char_rnn_forward_seq.1} parent=5 // pred_check
        _
      $region34: #{char_rnn_forward_seq.1} parent=5 // pred_check_branch
        %189 = sbr.rel (%p186) target = $region36
      $region35: #{char_rnn_forward_seq.1} parent=5 // pred_region
        %s190 = ssub.s32 %s22, 1
        %p191 = pneg %p43
        %p192 = pneg %p40
        %p193 = pneg %p64
        %p194 = pneg %p61
        %p195 = pneg %p85
        %p196 = pneg %p82
        %p197 = pneg %p106
        %p198 = pneg %p103
        %p199 = pneg %p132
        %p200 = pneg %p129
        %s201 = sand.u32 %s119, 1
        %s202 = scalar_lea.sflag [#allocation5], %s201
        %s203 = sand.u32 %s119, 1
        %s204 = smul.addr %s203, 2
        %s205 = scalar_lea.vmem [#allocation4], %s204
        %p206 = pneg %p153
        %p207 = pneg %p150
        %p208 = scmp.eq.s32.totalorder %s27, 0
        // Predicated region
        $region37: #{char_rnn_forward_seq.1} parent=35 // pred_check
          %p209 = pneg %p208
        $region38: #{char_rnn_forward_seq.1} parent=35 // pred_check_branch
          %211 = sbr.rel (%p209) target = $region40
        $region39: #{char_rnn_forward_seq.1} parent=35 // pred_region
          %v212 = vld [vmem:[%s4] sm:$0x3]
          %213 = vst [vmem:[%s6] sm:$0x3] %v212
        $region40: #{char_rnn_forward_seq.1} parent=35 // pred_fallthru
          _
        %s214 = smul.u32 %s27, 2
        %s215 = sld [smem:[#allocation3 + %s214]]
        %s216 = scalar_lea.vmem %s1, %s215
        %v217 = vld [vmem:[%s216] sm:$0x1]
        %s218 = sadd.s32 %s214, 1
        %s219 = sld [smem:[#allocation3 + %s218]]
        %s220 = scalar_lea.vmem %s1, %s219
        %v221 = vld [vmem:[%s220] sm:$0x1]
        %v223 = vlaneseq
        %v224 = vshrl.u32 %v223, 7
        %v225 = vsub.s32 0, %v224
        %v226 = vrot.slane %v221, %v225
        %vm228 = vcmask 1040384
        %v229 = vsel %vm228, %v217, %v226
        %v230 = vld [vmem:[%s6] sm:$0x3]
        %v231 = vld [vmem:[%s2] sm:$0xff]
        %v232 = vld [vmem:[%s2 + $0x8] sm:$0xff]
        %v233 = vld [vmem:[%s2 + $0x10] sm:$0xff]
        %v234 = vld [vmem:[%s2 + $0x18] sm:$0xff]
        %s235 = scalar_lea.vmem %s2, 32
        %v236 = vld [vmem:[%s235] sm:$0xff]
        %v237 = vld [vmem:[%s235 + $0x8] sm:$0xff]
        %v238 = vld [vmem:[%s235 + $0x10] sm:$0xff]
        %v239 = vld [vmem:[%s235 + $0x18] sm:$0xff]
        %vm240 = vcmask 261120
        %v242 = vsel %vm240, %v230, 0
        %244 = vmatprep.subr.mxu0 0.0
        %245 = vmatpush1.msra.mxu0 %v236
        %246 = vmatprep.subr.mxu0 0.0
        %247 = vmatpush1.msra.mxu0 %v237
        %248 = vmatprep.subr.mxu0 0.0
        %249 = vmatpush1.msra.mxu0 %v238
        %250 = vmatprep.subr.mxu0 0.0
        %251 = vmatpush1.msra.mxu0 %v239
        %252 = vmatprep.subr.mxu0 0.0
        %253 = vmatpush1.msra.mxu0 0.0
        %254 = vmatprep.subr.mxu0 0.0
        %255 = vmatpush1.msra.mxu0 0.0
        %256 = vmatprep.subr.mxu0 0.0
        %257 = vmatpush1.msra.mxu0 0.0
        %258 = vmatprep.subr.mxu0 0.0
        %259 = vmatpush1.msra.mxu0 0.0
        %260 = vmatprep.subr.mxu0 0.0
        %261 = vmatpush1.msra.mxu0 0.0
        %262 = vmatprep.subr.mxu0 0.0
        %263 = vmatpush1.msra.mxu0 0.0
        %264 = vmatprep.subr.mxu0 0.0
        %265 = vmatpush1.msra.mxu0 0.0
        %266 = vmatprep.subr.mxu0 0.0
        %267 = vmatpush1.msra.mxu0 0.0
        %268 = vmatprep.subr.mxu0 0.0
        %269 = vmatpush1.msra.mxu0 0.0
        %270 = vmatprep.subr.mxu0 0.0
        %271 = vmatpush1.msra.mxu0 0.0
        %272 = vmatprep.subr.mxu0 0.0
        %273 = vmatpush1.msra.mxu0 0.0
        %274 = vmatprep.subr.mxu0 0.0
        %275 = vmatpush1.msra.mxu0 0.0
        %276 = vmatprep.subr.mxu0 0.0
        %277 = vmatpush1.msra.mxu0 0.0
        %278 = vmatprep.subr.mxu0 0.0
        %279 = vmatpush1.msra.mxu0 0.0
        %280 = vmatprep.subr.mxu0 0.0
        %281 = vmatpush1.msra.mxu0 0.0
        %282 = vmatprep.subr.mxu0 0.0
        %283 = vmatpush1.msra.mxu0 0.0
        %284 = vmatprep.subr.mxu0 0.0
        %285 = vmatpush1.msra.mxu0 0.0
        %286 = vmatprep.subr.mxu0 0.0
        %287 = vmatpush1.msra.mxu0 0.0
        %288 = vmatprep.subr.mxu0 0.0
        %289 = vmatpush1.msra.mxu0 0.0
        %290 = vmatprep.subr.mxu0 0.0
        %291 = vmatpush1.msra.mxu0 0.0
        %292 = vmatprep.subr.mxu0 0.0
        %293 = vmatpush1.msra.mxu0 0.0
        %294 = vmatprep.subr.mxu0 0.0
        %295 = vmatpush1.msra.mxu0 0.0
        %296 = vmatprep.subr.mxu0 0.0
        %297 = vmatpush1.msra.mxu0 0.0
        %298 = vmatprep.subr.mxu0 0.0
        %299 = vmatpush1.msra.mxu0 0.0
        %300 = vmatprep.subr.mxu0 0.0
        %301 = vmatpush1.msra.mxu0 0.0
        %302 = vmatprep.subr.mxu0 0.0
        %303 = vmatpush1.msra.mxu0 0.0
        %304 = vmatprep.subr.mxu0 0.0
        %305 = vmatpush1.msra.mxu0 0.0
        %306 = vmatprep.subr.mxu0 0.0
        %307 = vmatpush1.msra.mxu0 0.0
        %308 = vmatprep.mubr.f32.mxu0 0.0
        %309 = vmatmul.mubr.f32.gmra.mrb[0].mxu0 %v242
        %v310 = vpop.f32.mrb[0].mxu0
        %v311 = vadd.f32 0.0, %v310
        %v312 = vpop.f32.mrb[0].mxu0
        %313 = vdwg.mxu0
        %v315 = vsel %vm240, %v229, 0
        %317 = vmatprep.subr.mxu0 0.0
        %318 = vmatpush1.msra.mxu0 %v231
        %319 = vmatprep.subr.mxu0 0.0
        %320 = vmatpush1.msra.mxu0 %v232
        %321 = vmatprep.subr.mxu0 0.0
        %322 = vmatpush1.msra.mxu0 %v233
        %323 = vmatprep.subr.mxu0 0.0
        %324 = vmatpush1.msra.mxu0 %v234
        %325 = vmatprep.subr.mxu0 0.0
        %326 = vmatpush1.msra.mxu0 0.0
        %327 = vmatprep.subr.mxu0 0.0
        %328 = vmatpush1.msra.mxu0 0.0
        %329 = vmatprep.subr.mxu0 0.0
        %330 = vmatpush1.msra.mxu0 0.0
        %331 = vmatprep.subr.mxu0 0.0
        %332 = vmatpush1.msra.mxu0 0.0
        %333 = vmatprep.subr.mxu0 0.0
        %334 = vmatpush1.msra.mxu0 0.0
        %335 = vmatprep.subr.mxu0 0.0
        %336 = vmatpush1.msra.mxu0 0.0
        %337 = vmatprep.subr.mxu0 0.0
        %338 = vmatpush1.msra.mxu0 0.0
        %339 = vmatprep.subr.mxu0 0.0
        %340 = vmatpush1.msra.mxu0 0.0
        %341 = vmatprep.subr.mxu0 0.0
        %342 = vmatpush1.msra.mxu0 0.0
        %343 = vmatprep.subr.mxu0 0.0
        %344 = vmatpush1.msra.mxu0 0.0
        %345 = vmatprep.subr.mxu0 0.0
        %346 = vmatpush1.msra.mxu0 0.0
        %347 = vmatprep.subr.mxu0 0.0
        %348 = vmatpush1.msra.mxu0 0.0
        %349 = vmatprep.subr.mxu0 0.0
        %350 = vmatpush1.msra.mxu0 0.0
        %351 = vmatprep.subr.mxu0 0.0
        %352 = vmatpush1.msra.mxu0 0.0
        %353 = vmatprep.subr.mxu0 0.0
        %354 = vmatpush1.msra.mxu0 0.0
        %355 = vmatprep.subr.mxu0 0.0
        %356 = vmatpush1.msra.mxu0 0.0
        %357 = vmatprep.subr.mxu0 0.0
        %358 = vmatpush1.msra.mxu0 0.0
        %359 = vmatprep.subr.mxu0 0.0
        %360 = vmatpush1.msra.mxu0 0.0
        %361 = vmatprep.subr.mxu0 0.0
        %362 = vmatpush1.msra.mxu0 0.0
        %363 = vmatprep.subr.mxu0 0.0
        %364 = vmatpush1.msra.mxu0 0.0
        %365 = vmatprep.subr.mxu0 0.0
        %366 = vmatpush1.msra.mxu0 0.0
        %367 = vmatprep.subr.mxu0 0.0
        %368 = vmatpush1.msra.mxu0 0.0
        %369 = vmatprep.subr.mxu0 0.0
        %370 = vmatpush1.msra.mxu0 0.0
        %371 = vmatprep.subr.mxu0 0.0
        %372 = vmatpush1.msra.mxu0 0.0
        %373 = vmatprep.subr.mxu0 0.0
        %374 = vmatpush1.msra.mxu0 0.0
        %375 = vmatprep.subr.mxu0 0.0
        %376 = vmatpush1.msra.mxu0 0.0
        %377 = vmatprep.subr.mxu0 0.0
        %378 = vmatpush1.msra.mxu0 0.0
        %379 = vmatprep.subr.mxu0 0.0
        %380 = vmatpush1.msra.mxu0 0.0
        %381 = vmatprep.mubr.f32.mxu0 0.0
        %382 = vmatmul.mubr.f32.gmra.mrb[0].mxu0 %v315
        %v383 = vpop.f32.mrb[0].mxu0
        %v384 = vadd.f32 %v311, %v383
        %v385 = vpop.f32.mrb[0].mxu0
        %386 = vdwg.mxu0
        %v387 = vld [vmem:[%s3] sm:$0x1]
        %v389 = vlaneseq
        %v390 = vshrl.u32 %v389, 7
        %v391 = vsub.s32 0, %v390
        %v392 = vrot.slane %v387, %v391
        %v394 = vadd.f32 %v384, %v392
        %v395 = vxor.u32 %v394, 2147483648
        %v396 = vmul.f32 %v395, 1.442695
        %v397 = vpow.pop %v396
        %v398 = vadd.f32 %v397, 1.0
        %v399 = vrcp.pop %v398
        %v400 = vmul.f32 1.0, %v399
        %v401 = vtanh.pop %v394
        %v402 = vmul.f32 %v400, %v230
        %404 = vrot.lane.b32.xlu0 %v401, 64
        %v405 = vpop.permute.xlu0 %404
        %v407 = vmul.f32 %v400, %v405
        %409 = vrot.lane.b32.xlu0 %v407, 32
        %v410 = vpop.permute.xlu0 %409
        %v412 = vadd.f32 %v402, %v410
        %v413 = vtanh.pop %v412
        %415 = vrot.lane.b32.xlu0 %v413, 64
        %v416 = vpop.permute.xlu0 %415
        %v418 = vmul.f32 %v400, %v416
        %s419 = scalar_lea.vmem %s2, 64
        %v420 = vld [vmem:[%s419] sm:$0xff]
        %v421 = vld [vmem:[%s419 + $0x8] sm:$0xff]
        %v422 = vld [vmem:[%s419 + $0x10] sm:$0xff]
        %v423 = vld [vmem:[%s419 + $0x18] sm:$0xff]
        %s424 = scalar_lea.vmem %s2, 96
        %v425 = vld [vmem:[%s424] sm:$0xff]
        %v426 = vld [vmem:[%s424 + $0x8] sm:$0xff]
        %v427 = vld [vmem:[%s424 + $0x10] sm:$0xff]
        %v428 = vld [vmem:[%s424 + $0x18] sm:$0xff]
        %429 = vrot.lane.b32.xlu0 %v230, 64
        %v430 = vpop.permute.xlu0 %429
        %v431 = vsel %vm240, %v430, 0
        %433 = vmatprep.subr.mxu0 0.0
        %434 = vmatpush1.msra.mxu0 %v425
        %435 = vmatprep.subr.mxu0 0.0
        %436 = vmatpush1.msra.mxu0 %v426
        %437 = vmatprep.subr.mxu0 0.0
        %438 = vmatpush1.msra.mxu0 %v427
        %439 = vmatprep.subr.mxu0 0.0
        %440 = vmatpush1.msra.mxu0 %v428
        %441 = vmatprep.subr.mxu0 0.0
        %442 = vmatpush1.msra.mxu0 0.0
        %443 = vmatprep.subr.mxu0 0.0
        %444 = vmatpush1.msra.mxu0 0.0
        %445 = vmatprep.subr.mxu0 0.0
        %446 = vmatpush1.msra.mxu0 0.0
        %447 = vmatprep.subr.mxu0 0.0
        %448 = vmatpush1.msra.mxu0 0.0
        %449 = vmatprep.subr.mxu0 0.0
        %450 = vmatpush1.msra.mxu0 0.0
        %451 = vmatprep.subr.mxu0 0.0
        %452 = vmatpush1.msra.mxu0 0.0
        %453 = vmatprep.subr.mxu0 0.0
        %454 = vmatpush1.msra.mxu0 0.0
        %455 = vmatprep.subr.mxu0 0.0
        %456 = vmatpush1.msra.mxu0 0.0
        %457 = vmatprep.subr.mxu0 0.0
        %458 = vmatpush1.msra.mxu0 0.0
        %459 = vmatprep.subr.mxu0 0.0
        %460 = vmatpush1.msra.mxu0 0.0
        %461 = vmatprep.subr.mxu0 0.0
        %462 = vmatpush1.msra.mxu0 0.0
        %463 = vmatprep.subr.mxu0 0.0
        %464 = vmatpush1.msra.mxu0 0.0
        %465 = vmatprep.subr.mxu0 0.0
        %466 = vmatpush1.msra.mxu0 0.0
        %467 = vmatprep.subr.mxu0 0.0
        %468 = vmatpush1.msra.mxu0 0.0
        %469 = vmatprep.subr.mxu0 0.0
        %470 = vmatpush1.msra.mxu0 0.0
        %471 = vmatprep.subr.mxu0 0.0
        %472 = vmatpush1.msra.mxu0 0.0
        %473 = vmatprep.subr.mxu0 0.0
        %474 = vmatpush1.msra.mxu0 0.0
        %475 = vmatprep.subr.mxu0 0.0
        %476 = vmatpush1.msra.mxu0 0.0
        %477 = vmatprep.subr.mxu0 0.0
        %478 = vmatpush1.msra.mxu0 0.0
        %479 = vmatprep.subr.mxu0 0.0
        %480 = vmatpush1.msra.mxu0 0.0
        %481 = vmatprep.subr.mxu0 0.0
        %482 = vmatpush1.msra.mxu0 0.0
        %483 = vmatprep.subr.mxu0 0.0
        %484 = vmatpush1.msra.mxu0 0.0
        %485 = vmatprep.subr.mxu0 0.0
        %486 = vmatpush1.msra.mxu0 0.0
        %487 = vmatprep.subr.mxu0 0.0
        %488 = vmatpush1.msra.mxu0 0.0
        %489 = vmatprep.subr.mxu0 0.0
        %490 = vmatpush1.msra.mxu0 0.0
        %491 = vmatprep.subr.mxu0 0.0
        %492 = vmatpush1.msra.mxu0 0.0
        %493 = vmatprep.subr.mxu0 0.0
        %494 = vmatpush1.msra.mxu0 0.0
        %495 = vmatprep.subr.mxu0 0.0
        %496 = vmatpush1.msra.mxu0 0.0
        %497 = vmatprep.mubr.f32.mxu0 0.0
        %498 = vmatmul.mubr.f32.gmra.mrb[0].mxu0 %v431
        %v499 = vpop.f32.mrb[0].mxu0
        %v500 = vadd.f32 0.0, %v499
        %v501 = vpop.f32.mrb[0].mxu0
        %502 = vdwg.mxu0
        %504 = vrot.lane.b32.xlu0 %v418, 32
        %v505 = vpop.permute.xlu0 %504
        %v506 = vsel %vm240, %v505, 0
        %508 = vmatprep.subr.mxu0 0.0
        %509 = vmatpush1.msra.mxu0 %v420
        %510 = vmatprep.subr.mxu0 0.0
        %511 = vmatpush1.msra.mxu0 %v421
        %512 = vmatprep.subr.mxu0 0.0
        %513 = vmatpush1.msra.mxu0 %v422
        %514 = vmatprep.subr.mxu0 0.0
        %515 = vmatpush1.msra.mxu0 %v423
        %516 = vmatprep.subr.mxu0 0.0
        %517 = vmatpush1.msra.mxu0 0.0
        %518 = vmatprep.subr.mxu0 0.0
        %519 = vmatpush1.msra.mxu0 0.0
        %520 = vmatprep.subr.mxu0 0.0
        %521 = vmatpush1.msra.mxu0 0.0
        %522 = vmatprep.subr.mxu0 0.0
        %523 = vmatpush1.msra.mxu0 0.0
        %524 = vmatprep.subr.mxu0 0.0
        %525 = vmatpush1.msra.mxu0 0.0
        %526 = vmatprep.subr.mxu0 0.0
        %527 = vmatpush1.msra.mxu0 0.0
        %528 = vmatprep.subr.mxu0 0.0
        %529 = vmatpush1.msra.mxu0 0.0
        %530 = vmatprep.subr.mxu0 0.0
        %531 = vmatpush1.msra.mxu0 0.0
        %532 = vmatprep.subr.mxu0 0.0
        %533 = vmatpush1.msra.mxu0 0.0
        %534 = vmatprep.subr.mxu0 0.0
        %535 = vmatpush1.msra.mxu0 0.0
        %536 = vmatprep.subr.mxu0 0.0
        %537 = vmatpush1.msra.mxu0 0.0
        %538 = vmatprep.subr.mxu0 0.0
        %539 = vmatpush1.msra.mxu0 0.0
        %540 = vmatprep.subr.mxu0 0.0
        %541 = vmatpush1.msra.mxu0 0.0
        %542 = vmatprep.subr.mxu0 0.0
        %543 = vmatpush1.msra.mxu0 0.0
        %544 = vmatprep.subr.mxu0 0.0
        %545 = vmatpush1.msra.mxu0 0.0
        %546 = vmatprep.subr.mxu0 0.0
        %547 = vmatpush1.msra.mxu0 0.0
        %548 = vmatprep.subr.mxu0 0.0
        %549 = vmatpush1.msra.mxu0 0.0
        %550 = vmatprep.subr.mxu0 0.0
        %551 = vmatpush1.msra.mxu0 0.0
        %552 = vmatprep.subr.mxu0 0.0
        %553 = vmatpush1.msra.mxu0 0.0
        %554 = vmatprep.subr.mxu0 0.0
        %555 = vmatpush1.msra.mxu0 0.0
        %556 = vmatprep.subr.mxu0 0.0
        %557 = vmatpush1.msra.mxu0 0.0
        %558 = vmatprep.subr.mxu0 0.0
        %559 = vmatpush1.msra.mxu0 0.0
        %560 = vmatprep.subr.mxu0 0.0
        %561 = vmatpush1.msra.mxu0 0.0
        %562 = vmatprep.subr.mxu0 0.0
        %563 = vmatpush1.msra.mxu0 0.0
        %564 = vmatprep.subr.mxu0 0.0
        %565 = vmatpush1.msra.mxu0 0.0
        %566 = vmatprep.subr.mxu0 0.0
        %567 = vmatpush1.msra.mxu0 0.0
        %568 = vmatprep.subr.mxu0 0.0
        %569 = vmatpush1.msra.mxu0 0.0
        %570 = vmatprep.subr.mxu0 0.0
        %571 = vmatpush1.msra.mxu0 0.0
        %572 = vmatprep.mubr.f32.mxu0 0.0
        %573 = vmatmul.mubr.f32.gmra.mrb[0].mxu0 %v506
        %v574 = vpop.f32.mrb[0].mxu0
        %v575 = vadd.f32 %v500, %v574
        %v576 = vpop.f32.mrb[0].mxu0
        %577 = vdwg.mxu0
        %s578 = scalar_lea.vmem %s3, 1
        %v579 = vld [vmem:[%s578] sm:$0x1]
        %v581 = vlaneseq
        %v582 = vshrl.u32 %v581, 7
        %v583 = vsub.s32 0, %v582
        %v584 = vrot.slane %v579, %v583
        %v586 = vadd.f32 %v575, %v584
        %v587 = vxor.u32 %v586, 2147483648
        %v588 = vmul.f32 %v587, 1.442695
        %v589 = vpow.pop %v588
        %v590 = vadd.f32 %v589, 1.0
        %v591 = vrcp.pop %v590
        %v592 = vmul.f32 1.0, %v591
        %v593 = vtanh.pop %v586
        %v595 = vmul.f32 %v592, %v430
        %597 = vrot.lane.b32.xlu0 %v593, 64
        %v598 = vpop.permute.xlu0 %597
        %v600 = vmul.f32 %v592, %v598
        %602 = vrot.lane.b32.xlu0 %v600, 32
        %v603 = vpop.permute.xlu0 %602
        %v605 = vadd.f32 %v595, %v603
        %v606 = vtanh.pop %v605
        %608 = vrot.lane.b32.xlu0 %v606, 64
        %v609 = vpop.permute.xlu0 %608
        %v611 = vmul.f32 %v592, %v609
        %614 = vrot.lane.b32.xlu0 %v611, 96
        %v615 = vpop.permute.xlu0 %614
        %618 = vrot.lane.b32.xlu0 %v605, 64
        %v619 = vpop.permute.xlu0 %618
        %v621 = vsel %vm240, %v505, %v412
        %vm622 = vcmask 523264
        %v623 = vsel %vm622, %v621, %v615
        %vm624 = vcmask 785408
        %v625 = vsel %vm624, %v623, %v619
        %626 = vst [vmem:[%s6] sm:$0x3] %v625
        %s627 = scalar_lea.vmem %s2, 128
        %v628 = vld [vmem:[%s627] sm:$0xff]
        %v629 = vld [vmem:[%s627 + $0x8] sm:$0xff]
        %v630 = vld [vmem:[%s627 + $0x10] sm:$0xff]
        %v631 = vld [vmem:[%s627 + $0x18] sm:$0xff]
        %s632 = scalar_lea.vmem %s3, 2
        %v633 = vld [vmem:[%s632] sm:$0x1]
        %v635 = vlaneseq
        %v636 = vshrl.u32 %v635, 7
        %v637 = vsub.s32 0, %v636
        %v638 = vrot.slane %v633, %v637
        %640 = vrot.lane.b32.xlu0 %v611, 32
        %v641 = vpop.permute.xlu0 %640
        %v642 = vsel %vm240, %v641, 0
        %644 = vmatprep.subr.mxu0 0.0
        %645 = vmatpush1.msra.mxu0 %v628
        %646 = vmatprep.subr.mxu0 0.0
        %647 = vmatpush1.msra.mxu0 %v629
        %648 = vmatprep.subr.mxu0 0.0
        %649 = vmatpush1.msra.mxu0 %v630
        %650 = vmatprep.subr.mxu0 0.0
        %651 = vmatpush1.msra.mxu0 %v631
        %652 = vmatprep.subr.mxu0 0.0
        %653 = vmatpush1.msra.mxu0 0.0
        %654 = vmatprep.subr.mxu0 0.0
        %655 = vmatpush1.msra.mxu0 0.0
        %656 = vmatprep.subr.mxu0 0.0
        %657 = vmatpush1.msra.mxu0 0.0
        %658 = vmatprep.subr.mxu0 0.0
        %659 = vmatpush1.msra.mxu0 0.0
        %660 = vmatprep.subr.mxu0 0.0
        %661 = vmatpush1.msra.mxu0 0.0
        %662 = vmatprep.subr.mxu0 0.0
        %663 = vmatpush1.msra.mxu0 0.0
        %664 = vmatprep.subr.mxu0 0.0
        %665 = vmatpush1.msra.mxu0 0.0
        %666 = vmatprep.subr.mxu0 0.0
        %667 = vmatpush1.msra.mxu0 0.0
        %668 = vmatprep.subr.mxu0 0.0
        %669 = vmatpush1.msra.mxu0 0.0
        %670 = vmatprep.subr.mxu0 0.0
        %671 = vmatpush1.msra.mxu0 0.0
        %672 = vmatprep.subr.mxu0 0.0
        %673 = vmatpush1.msra.mxu0 0.0
        %674 = vmatprep.subr.mxu0 0.0
        %675 = vmatpush1.msra.mxu0 0.0
        %676 = vmatprep.subr.mxu0 0.0
        %677 = vmatpush1.msra.mxu0 0.0
        %678 = vmatprep.subr.mxu0 0.0
        %679 = vmatpush1.msra.mxu0 0.0
        %680 = vmatprep.subr.mxu0 0.0
        %681 = vmatpush1.msra.mxu0 0.0
        %682 = vmatprep.subr.mxu0 0.0
        %683 = vmatpush1.msra.mxu0 0.0
        %684 = vmatprep.subr.mxu0 0.0
        %685 = vmatpush1.msra.mxu0 0.0
        %686 = vmatprep.subr.mxu0 0.0
        %687 = vmatpush1.msra.mxu0 0.0
        %688 = vmatprep.subr.mxu0 0.0
        %689 = vmatpush1.msra.mxu0 0.0
        %690 = vmatprep.subr.mxu0 0.0
        %691 = vmatpush1.msra.mxu0 0.0
        %692 = vmatprep.subr.mxu0 0.0
        %693 = vmatpush1.msra.mxu0 0.0
        %694 = vmatprep.subr.mxu0 0.0
        %695 = vmatpush1.msra.mxu0 0.0
        %696 = vmatprep.subr.mxu0 0.0
        %697 = vmatpush1.msra.mxu0 0.0
        %698 = vmatprep.subr.mxu0 0.0
        %699 = vmatpush1.msra.mxu0 0.0
        %700 = vmatprep.subr.mxu0 0.0
        %701 = vmatpush1.msra.mxu0 0.0
        %702 = vmatprep.subr.mxu0 0.0
        %703 = vmatpush1.msra.mxu0 0.0
        %704 = vmatprep.subr.mxu0 0.0
        %705 = vmatpush1.msra.mxu0 0.0
        %706 = vmatprep.subr.mxu0 0.0
        %707 = vmatpush1.msra.mxu0 0.0
        %708 = vmatprep.mubr.f32.mxu0 0.0
        %709 = vmatmul.mubr.f32.gmra.mrb[0].mxu0 %v642
        %v710 = vpop.f32.mrb[0].mxu0
        %v711 = vadd.f32 %v638, %v710
        %v712 = vpop.f32.mrb[0].mxu0
        %713 = vdwg.mxu0
        %714 = vst [vmem:[%s205] sm:$0x3] %v711
        %s715 = sand.u32 %s119, 1
        %s716 = scalar_lea.sflag [#allocation5], %s715
        %s717 = sand.u32 %s119, 1
        %s718 = smul.addr %s717, 2
        %s719 = scalar_lea.vmem [#allocation4], %s718
        // Predicated region
        $region41: #{char_rnn_forward_seq.1} parent=35 // pred_check
          %p720 = pneg %p129
        $region42: #{char_rnn_forward_seq.1} parent=35 // pred_check_branch
          %722 = sbr.rel (%p720) target = $region44
        $region43: #{char_rnn_forward_seq.1} parent=35 // pred_region
          %s724 = ssub.s32 32, 32
          %725 = vsyncadd %s716, %s724
          %s726 = smul.addr %s27, 32
          %s727 = scalar_lea.hbm %s5, %s726
          %s729 = sshll.u32 %s719, 4
          %s730 = int_to_ptr.vmem [resolvable:$true] %s729
          %732 = dma.vmem_to_hbm [thread:$0]  %s730, 32, %s727, %s716
        $region44: #{char_rnn_forward_seq.1} parent=35 // pred_fallthru
          _
        // Predicated region
        $region45: #{char_rnn_forward_seq.1} parent=35 // pred_check
          %p733 = pneg %p150
        $region46: #{char_rnn_forward_seq.1} parent=35 // pred_check_branch
          %735 = sbr.rel (%p733) target = $region48
        $region47: #{char_rnn_forward_seq.1} parent=35 // pred_region
          _
        $region48: #{char_rnn_forward_seq.1} parent=35 // pred_fallthru
          _
        // Predicated region
        $region49: #{char_rnn_forward_seq.1} parent=35 // pred_check
          %p736 = pneg %p150
        $region50: #{char_rnn_forward_seq.1} parent=35 // pred_check_branch
          %738 = sbr.rel (%p736) target = $region52
        $region51: #{char_rnn_forward_seq.1} parent=35 // pred_region
          _
        $region52: #{char_rnn_forward_seq.1} parent=35 // pred_fallthru
          _
      $region36: #{char_rnn_forward_seq.1} parent=5 // pred_fallthru
        _
      %p739 = scmp.le.s32.totalorder 2, %s22
      // Predicated region
      $region53: #{char_rnn_forward_seq.1} parent=5 // pred_check
        %p740 = pneg %p739
      $region54: #{char_rnn_forward_seq.1} parent=5 // pred_check_branch
        %742 = sbr.rel (%p740) target = $region56
      $region55: #{char_rnn_forward_seq.1} parent=5 // pred_region
        %s743 = ssub.s32 %s22, 2
        // Predicated region
        $region57: #{char_rnn_forward_seq.1} parent=55 // pred_check
          %p744 = pneg %p135
        $region58: #{char_rnn_forward_seq.1} parent=55 // pred_check_branch
          %746 = sbr.rel (%p744) target = $region60
        $region59: #{char_rnn_forward_seq.1} parent=55 // pred_region
          %s747 = sand.u32 %s120, 1
          %s748 = scalar_lea.sflag [#allocation5], %s747
          %s749 = sand.u32 %s120, 1
          %s750 = smul.addr %s749, 2
          %s751 = scalar_lea.vmem [#allocation4], %s750
          %752 = dma.done %s748, 32
        $region60: #{char_rnn_forward_seq.1} parent=55 // pred_fallthru
          _
      $region56: #{char_rnn_forward_seq.1} parent=5 // pred_fallthru
        _
    $region6: #{char_rnn_forward_seq.1} parent=1 // loop_footer
      %s26 = sadd.s32 1, %s22
    $region7: #{char_rnn_forward_seq.1} parent=1 // loop_footer_branch
      %21 = sbr.rel target = $region3
    $region8: #{char_rnn_forward_seq.1} parent=1 // loop_exit
      _
    %753 = vsyncpa [#allocation5], 1
    %s754 = scalar_lea.sflag [#allocation5], 1
    %755 = vsyncpa %s754, 1

</llo_original>
